<compile_context>
chip_gen: v5e
topology: v5e:2x2
jax: 0.10.0
libtpu: 0.0.40
codegen_flags: <defaults>
</compile_context>

<pallas_src>
import functools

import jax
import jax.numpy as jnp
import numpy as np
from jax.experimental import pallas as pl
from jax.experimental.pallas import tpu as pltpu


# ----------------------------- Pallas kernel --------------------------------
def _proj_matmul_kernel(a_ref, w_ref, b_ref, o_ref, acc_ref):
    # a_ref: (TM, TK) im2col patches tile
    # w_ref: (TK, TN) projection weight tile
    # b_ref: (1, TN)  bias tile (f32)
    # o_ref: (TM, TN) output tile
    # acc_ref: (TM, TN) f32 VMEM accumulator, resident across the K axis
    kk = pl.program_id(2)

    @pl.when(kk == 0)
    def _():
        acc_ref[...] = jnp.zeros_like(acc_ref)

    acc_ref[...] += jnp.dot(a_ref[...], w_ref[...],
                            preferred_element_type=jnp.float32)

    @pl.when(kk == pl.num_programs(2) - 1)
    def _():
        o_ref[...] = (acc_ref[...] + b_ref[...]).astype(o_ref.dtype)


def _round_up(x, m):
    return (x + m - 1) // m * m


def _proj_matmul(a, w, b, *, out_dtype, compute_dtype=None,
                 tm=256, tn=512, tk=512):
    """Tiled, pipelined (M,K)@(K,N)+bias on the MXU."""
    M, K = a.shape
    _, N = w.shape

    if compute_dtype is not None:
        a = a.astype(compute_dtype)
        w = w.astype(compute_dtype)

    # Pad to TPU-friendly sizes: lane-dense N, (8,128)-aligned K, sublane-
    # aligned M. Zero padding along K contributes exactly 0 to the reduction.
    Mp = _round_up(M, 8)
    Kp = _round_up(K, 128)
    Np = _round_up(N, 128)
    TM = min(tm, Mp)
    TK = min(tk, Kp)
    TN = min(tn, Np)
    Mp = _round_up(Mp, TM)
    Kp = _round_up(Kp, TK)
    Np = _round_up(Np, TN)

    a = jnp.pad(a, ((0, Mp - M), (0, Kp - K)))
    w = jnp.pad(w, ((0, Kp - K), (0, Np - N)))
    b = jnp.pad(b, ((0, 0), (0, Np - N)))

    grid = (Mp // TM, Np // TN, Kp // TK)

    in_item = jnp.dtype(a.dtype).itemsize
    cost = pl.CostEstimate(
        flops=2 * Mp * Kp * Np,
        transcendentals=0,
        bytes_accessed=(Mp * Kp + Kp * Np) * in_item
        + Mp * Np * jnp.dtype(out_dtype).itemsize + Np * 4,
    )

    out = pl.pallas_call(
        _proj_matmul_kernel,
        out_shape=jax.ShapeDtypeStruct((Mp, Np), out_dtype),
        grid_spec=pltpu.PrefetchScalarGridSpec(
            num_scalar_prefetch=0,
            grid=grid,
            in_specs=[
                pl.BlockSpec((TM, TK), lambda i, j, kk: (i, kk)),
                pl.BlockSpec((TK, TN), lambda i, j, kk: (kk, j)),
                pl.BlockSpec((1, TN), lambda i, j, kk: (0, j)),
            ],
            out_specs=pl.BlockSpec((TM, TN), lambda i, j, kk: (i, j)),
            scratch_shapes=[pltpu.VMEM((TM, TN), jnp.float32)],
        ),
        compiler_params=pltpu.CompilerParams(
            dimension_semantics=("parallel", "parallel", "arbitrary")),
        cost_estimate=cost,
    )(a, w, b)
    return out[:M, :N]


# ------------------------------ PatchEmbed -----------------------------------
def prepare_proj_weight(weight):
    """OIHW conv weight -> (C*k*k, E) projection matrix.

    Under jit this folds/fuses once; for eager repeated calls, precompute it
    once outside the per-forward path.
    """
    E = weight.shape[0]
    return weight.reshape(E, -1).T


def patch_embed_forward(x, weight, bias, *, patch_size, kernel_size=None,
                        compute_dtype=None, tm=256, tn=512, tk=512):
    """Forward pass matching PyTorch PatchEmbed.

    x:      (B, C, H, W)   NCHW
    weight: (E, C, k, k)   conv weight (OIHW)
    bias:   (E,)
    returns (B, E, Hp, Wp) NCHW
    """
    if kernel_size is None:
        kernel_size = patch_size
    k, p = kernel_size, patch_size
    pad = (k - p + 1) // 2

    B, C, H, W = x.shape
    E = weight.shape[0]
    out_dtype = x.dtype

    # --- glue: reflect pad (only when kernel overlaps patches) ---
    if pad > 0:
        x = jnp.pad(x, ((0, 0), (0, 0), (pad, pad), (pad, pad)), mode="reflect")
    Hpad, Wpad = H + 2 * pad, W + 2 * pad
    Hp = (Hpad - k) // p + 1
    Wp = (Wpad - k) // p + 1

    if k == p and pad == 0:
        # Non-overlapping patches: pure reshape + transpose (no gather, no
        # extra full-input HBM round trip beyond the layout change).
        patches = x.reshape(B, C, Hp, p, Wp, p)
        patches = jnp.transpose(patches, (0, 2, 4, 1, 3, 5))  # (B,Hp,Wp,C,kh,kw)
    else:
        # General overlapping case: gather-based im2col.
        # TODO(synk): drive patch extraction from the Pallas BlockSpec
        # index_map over (Hp, Wp) tiles so no im2col tensor is materialized.
        i_idx = jnp.arange(Hp)[:, None] * p + jnp.arange(k)[None, :]  # (Hp, k)
        j_idx = jnp.arange(Wp)[:, None] * p + jnp.arange(k)[None, :]  # (Wp, k)
        patches = x[:, :, i_idx, :]            # (B, C, Hp, k, Wpad)
        patches = patches[:, :, :, :, j_idx]   # (B, C, Hp, k, Wp, k)
        patches = jnp.transpose(patches, (0, 2, 4, 1, 3, 5))

    patches_2d = patches.reshape(B * Hp * Wp, C * k * k)   # (M, K), (C,kh,kw) order
    w_2d = prepare_proj_weight(weight)                     # (K, E)
    b_2d = bias.astype(jnp.float32).reshape(1, E)

    # --- hot path: tiled Pallas matmul + bias ---
    out_2d = _proj_matmul(patches_2d, w_2d, b_2d, out_dtype=out_dtype,
                          compute_dtype=compute_dtype, tm=tm, tn=tn, tk=tk)

    # --- glue: back to NCHW ---
    out = out_2d.reshape(B, Hp, Wp, E)
    return jnp.transpose(out, (0, 3, 1, 2))                # (B, E, Hp, Wp)


# ------------------------------ reference ------------------------------------
def _reference_conv(x, weight, bias, *, stride):
    out = jax.lax.conv_general_dilated(
        x, weight,
        window_strides=(stride, stride),
        padding="VALID",
        dimension_numbers=("NCHW", "OIHW", "NCHW"))
    return out + bias.reshape(1, -1, 1, 1)


# --------------------------------- main ---------------------------------------
if __name__ == "__main__":
    # Case 1: module defaults (kernel_size == patch_size, pad = 0), f32.
    B, C, H, W = 2, 4, 16, 16
    patch_size, embed_dim = 4, 32
    k = patch_size

    key = jax.random.PRNGKey(0)
    kx, kw, kb = jax.random.split(key, 3)
    x = jax.random.normal(kx, (B, C, H, W), dtype=jnp.float32)
    weight = 0.02 * jax.random.normal(kw, (embed_dim, C, k, k), dtype=jnp.float32)
    bias = 0.01 * jax.random.normal(kb, (embed_dim,), dtype=jnp.float32)

    fwd = jax.jit(functools.partial(patch_embed_forward, patch_size=patch_size))
    out = jax.block_until_ready(fwd(x, weight, bias))

    ref = jax.block_until_ready(_reference_conv(x, weight, bias, stride=patch_size))
    assert out.shape == (B, embed_dim, H // patch_size, W // patch_size)
    np.testing.assert_allclose(np.asarray(out), np.asarray(ref), rtol=1e-5, atol=1e-5)

    # bf16-fed MXU path (f32 accumulation + f32 bias), looser tolerance.
    fwd_bf16 = jax.jit(functools.partial(
        patch_embed_forward, patch_size=patch_size, compute_dtype=jnp.bfloat16))
    out_bf16 = jax.block_until_ready(fwd_bf16(x, weight, bias))
    np.testing.assert_allclose(np.asarray(out_bf16), np.asarray(ref),
                               rtol=2e-2, atol=2e-2)

    # Case 2: overlapping kernel with reflect padding (kernel_size != patch_size).
    k2 = 7
    pad2 = (k2 - patch_size + 1) // 2  # = 2
    kx2, kw2, kb2 = jax.random.split(jax.random.PRNGKey(1), 3)
    x2 = jax.random.normal(kx2, (B, C, H, W), dtype=jnp.float32)
    w2 = 0.02 * jax.random.normal(kw2, (embed_dim, C, k2, k2), dtype=jnp.float32)
    b2 = 0.01 * jax.random.normal(kb2, (embed_dim,), dtype=jnp.float32)

    out2 = jax.block_until_ready(
        patch_embed_forward(x2, w2, b2, patch_size=patch_size, kernel_size=k2))
    x2_pad = jnp.pad(x2, ((0, 0), (0, 0), (pad2, pad2), (pad2, pad2)),
                     mode="reflect")
    ref2 = jax.block_until_ready(_reference_conv(x2_pad, w2, b2, stride=patch_size))
    assert out2.shape == ref2.shape
    np.testing.assert_allclose(np.asarray(out2), np.asarray(ref2),
                               rtol=1e-5, atol=1e-5)

    print("KERNEL_OK")
</pallas_src>

<mosaic_0001>
module attributes {stable_mosaic.version = 11 : i64} {
  func.func @_proj_matmul_kernel(%arg0: i32, %arg1: i32, %arg2: i32, %arg3: memref<32x128xf32, #tpu.memory_space<vmem>>, %arg4: memref<128x128xf32, #tpu.memory_space<vmem>>, %arg5: memref<1x128xf32, #tpu.memory_space<vmem>>, %arg6: memref<32x128xf32, #tpu.memory_space<vmem>>, %arg7: memref<32x128xf32, #tpu.memory_space<vmem>>) attributes {dimension_semantics = [#tpu.dimension_semantics<parallel>, #tpu.dimension_semantics<parallel>, #tpu.dimension_semantics<arbitrary>], iteration_bounds = array<i64: 1, 1, 1>, scalar_prefetch = 0 : i64, scratch_operands = 1 : i64, tpu.core_type = #tpu.core_type<tc>, window_params = [{transform_indices = @transform_0, window_bounds = array<i64: 32, 128>}, {transform_indices = @transform_1, window_bounds = array<i64: 128, 128>}, {transform_indices = @transform_2, window_bounds = array<i64: 1, 128>}, {transform_indices = @transform_3, window_bounds = array<i64: 32, 128>}]} {
    %c0_i32 = arith.constant 0 : i32
    %0 = arith.cmpi eq, %arg2, %c0_i32 : i32
    %1 = arith.extui %0 : i1 to i32
    %c0_i32_0 = arith.constant 0 : i32
    %2 = arith.cmpi ne, %1, %c0_i32_0 : i32
    scf.if %2 {
      %cst_10 = arith.constant 0.000000e+00 : f32
      %12 = vector.broadcast %cst_10 : f32 to vector<32x128xf32>
      %c0_11 = arith.constant 0 : index
      %c0_12 = arith.constant 0 : index
      %13 = vector.load %arg7[%c0_11, %c0_12] : memref<32x128xf32, #tpu.memory_space<vmem>>, vector<32x128xf32>
      tpu.vector_store %arg7[%c0_11, %c0_12], %12 {strides = array<i32>} : memref<32x128xf32, #tpu.memory_space<vmem>>, vector<32x128xf32>,
    } else {
    }
    %c0 = arith.constant 0 : index
    %c0_1 = arith.constant 0 : index
    %3 = vector.load %arg7[%c0, %c0_1] : memref<32x128xf32, #tpu.memory_space<vmem>>, vector<32x128xf32>
    %c0_2 = arith.constant 0 : index
    %c0_3 = arith.constant 0 : index
    %4 = vector.load %arg3[%c0_2, %c0_3] : memref<32x128xf32, #tpu.memory_space<vmem>>, vector<32x128xf32>
    %c0_4 = arith.constant 0 : index
    %c0_5 = arith.constant 0 : index
    %5 = vector.load %arg4[%c0_4, %c0_5] : memref<128x128xf32, #tpu.memory_space<vmem>>, vector<128x128xf32>
    %cst = arith.constant dense<0.000000e+00> : vector<32x128xf32>
    %6 = tpu.matmul %4, %5, %cst {dimension_numbers = #tpu.dot_dimension_numbers<[1], [0], [0], [1], [0, 0, 1, 1], [], []>} : vector<32x128xf32>, vector<128x128xf32>, vector<32x128xf32> -> vector<32x128xf32>
    %7 = arith.addf %3, %6 : vector<32x128xf32>
    %c0_6 = arith.constant 0 : index
    %c0_7 = arith.constant 0 : index
    %8 = vector.load %arg7[%c0_6, %c0_7] : memref<32x128xf32, #tpu.memory_space<vmem>>, vector<32x128xf32>
    tpu.vector_store %arg7[%c0_6, %c0_7], %7 {strides = array<i32>} : memref<32x128xf32, #tpu.memory_space<vmem>>, vector<32x128xf32>,
    %c0_i32_8 = arith.constant 0 : i32
    %9 = arith.cmpi eq, %arg2, %c0_i32_8 : i32
    %10 = arith.extui %9 : i1 to i32
    %c0_i32_9 = arith.constant 0 : i32
    %11 = arith.cmpi ne, %10, %c0_i32_9 : i32
    scf.if %11 {
      %c0_10 = arith.constant 0 : index
      %c0_11 = arith.constant 0 : index
      %12 = vector.load %arg7[%c0_10, %c0_11] : memref<32x128xf32, #tpu.memory_space<vmem>>, vector<32x128xf32>
      %c0_12 = arith.constant 0 : index
      %c0_13 = arith.constant 0 : index
      %13 = vector.load %arg5[%c0_12, %c0_13] : memref<1x128xf32, #tpu.memory_space<vmem>>, vector<1x128xf32>
      %14 = vector.broadcast %13 : vector<1x128xf32> to vector<32x128xf32>
      %15 = arith.addf %12, %14 : vector<32x128xf32>
      %c0_14 = arith.constant 0 : index
      %c0_15 = arith.constant 0 : index
      %16 = vector.load %arg6[%c0_14, %c0_15] : memref<32x128xf32, #tpu.memory_space<vmem>>, vector<32x128xf32>
      tpu.vector_store %arg6[%c0_14, %c0_15], %15 {strides = array<i32>} : memref<32x128xf32, #tpu.memory_space<vmem>>, vector<32x128xf32>,
    } else {
    }
    return
  }
  func.func @transform_0(%arg0: i32, %arg1: i32, %arg2: i32) -> (i32, i32) {
    %c0_i32 = arith.constant 0 : i32
    return %arg0, %arg2 : i32, i32
  }
  func.func @transform_1(%arg0: i32, %arg1: i32, %arg2: i32) -> (i32, i32) {
    %c0_i32 = arith.constant 0 : i32
    return %arg2, %arg1 : i32, i32
  }
  func.func @transform_2(%arg0: i32, %arg1: i32, %arg2: i32) -> (i32, i32) {
    %c0_i32 = arith.constant 0 : i32
    %c0_i32_0 = arith.constant 0 : i32
    return %c0_i32, %arg1 : i32, i32
  }
  func.func @transform_3(%arg0: i32, %arg1: i32, %arg2: i32) -> (i32, i32) {
    %c0_i32 = arith.constant 0 : i32
    return %arg0, %arg1 : i32, i32
  }
}

</mosaic_0001>

<llo_original>
// kernel: patch_embed_forward.1
$region0: #{patch_embed_forward.1}
  #allocation0 [shape = 'u32[]', space=smem, size = 0x4, offset = 0x4, fixed_abs, tag = 'smem constant byte address 0x4 - core index']
  #allocation1 [shape = 'u32[72,128]{1,0:T(1,128)}', space=vmem, size = 0x9000, scoped, tag = 'internal scratch']
  #allocation2 [shape = 'f32[32,128]{1,0:T(8,128)}', space=vmem, size = 0x4000, scoped, tag = 'scratch operand']
  %s0 = inlined_call_operand.vmem [shape: f32[32,128], index: 0, kind: input, shape index: {}]
  %s1 = inlined_call_operand.vmem [shape: f32[128,128], index: 1, kind: input, shape index: {}]
  %s2 = inlined_call_operand.vmem [shape: f32[1,128], index: 2, kind: input, shape index: {}]
  %s3 = inlined_call_operand.hbm [shape: f32[32,128], index: 3, kind: output, shape index: {}]
  %s4 = sld [smem:[#allocation0]]
  $region30: #{patch_embed_forward.1} parent=0
    _
  %s6 = ssub.s32 1, %s4
  %s7 = scalar_select 0, %s6, %s4
  $region1: #{patch_embed_forward.1} parent=0
    #allocation3 [shape = 'u8[16384]{0}', space=vmem, size = 0x4000, scoped, tag = 'output window, operand 0, single buffered']
    #allocation4 [shape = 's32[1]{0}', space=sflag, size = 0x4, scoped, tag = 'scoped memory for patch_embed_forward.1']
    %8 = vsyncpa [#allocation4], 0
    // Predicated region
    $region2: #{patch_embed_forward.1} parent=1 // pred_check
      _
    $region3: #{patch_embed_forward.1} parent=1 // pred_check_branch
      %10 = sbr.rel (0) target = $region5
    $region4: #{patch_embed_forward.1} parent=1 // pred_region
      _
    $region5: #{patch_embed_forward.1} parent=1 // pred_fallthru
      _
    // Predicated region
    $region6: #{patch_embed_forward.1} parent=1 // pred_check
      _
    $region7: #{patch_embed_forward.1} parent=1 // pred_check_branch
      %12 = sbr.rel (0) target = $region9
    $region8: #{patch_embed_forward.1} parent=1 // pred_region
      _
    $region9: #{patch_embed_forward.1} parent=1 // pred_fallthru
      _
    // Predicated region
    $region10: #{patch_embed_forward.1} parent=1 // pred_check
      _
    $region11: #{patch_embed_forward.1} parent=1 // pred_check_branch
      %14 = sbr.rel (0) target = $region13
    $region12: #{patch_embed_forward.1} parent=1 // pred_region
      _
    $region13: #{patch_embed_forward.1} parent=1 // pred_fallthru
      _
    %p15 = scmp.eq.s32.totalorder 0, 0
    // Predicated region
    $region14: #{patch_embed_forward.1} parent=1 // pred_check
      %p16 = pneg %p15
    $region15: #{patch_embed_forward.1} parent=1 // pred_check_branch
      %18 = sbr.rel (%p16) target = $region17
    $region16: #{patch_embed_forward.1} parent=1 // pred_region
      %19 = vst [vmem:[#allocation2] sm:$0xff] 0.0
      %20 = vst [vmem:[#allocation2 + $0x8] sm:$0xff] 0.0
      %21 = vst [vmem:[#allocation2 + $0x10] sm:$0xff] 0.0
      %22 = vst [vmem:[#allocation2 + $0x18] sm:$0xff] 0.0
    $region17: #{patch_embed_forward.1} parent=1 // pred_fallthru
      _
    %v23 = vld [vmem:[#allocation2] sm:$0xff]
    %v24 = vld [vmem:[#allocation2 + $0x8] sm:$0xff]
    %v25 = vld [vmem:[#allocation2 + $0x10] sm:$0xff]
    %v26 = vld [vmem:[#allocation2 + $0x18] sm:$0xff]
    %v27 = vld [vmem:[%s0] sm:$0xff]
    %v28 = vld [vmem:[%s0 + $0x8] sm:$0xff]
    %v29 = vld [vmem:[%s0 + $0x10] sm:$0xff]
    %v30 = vld [vmem:[%s0 + $0x18] sm:$0xff]
    %v31 = vld [vmem:[%s1] sm:$0xff]
    %v32 = vld [vmem:[%s1 + $0x8] sm:$0xff]
    %v33 = vld [vmem:[%s1 + $0x10] sm:$0xff]
    %v34 = vld [vmem:[%s1 + $0x18] sm:$0xff]
    %v35 = vld [vmem:[%s1 + $0x20] sm:$0xff]
    %v36 = vld [vmem:[%s1 + $0x28] sm:$0xff]
    %v37 = vld [vmem:[%s1 + $0x30] sm:$0xff]
    %v38 = vld [vmem:[%s1 + $0x38] sm:$0xff]
    %v39 = vld [vmem:[%s1 + $0x40] sm:$0xff]
    %v40 = vld [vmem:[%s1 + $0x48] sm:$0xff]
    %v41 = vld [vmem:[%s1 + $0x50] sm:$0xff]
    %v42 = vld [vmem:[%s1 + $0x58] sm:$0xff]
    %v43 = vld [vmem:[%s1 + $0x60] sm:$0xff]
    %v44 = vld [vmem:[%s1 + $0x68] sm:$0xff]
    %v45 = vld [vmem:[%s1 + $0x70] sm:$0xff]
    %v46 = vld [vmem:[%s1 + $0x78] sm:$0xff]
    %47 = vmatpush.msra.mxu0 %v46
    %48 = vmatpush.msra.mxu0 %v45
    %49 = vmatpush.msra.mxu0 %v44
    %50 = vmatpush.msra.mxu0 %v43
    %51 = vmatpush.msra.mxu0 %v42
    %52 = vmatpush.msra.mxu0 %v41
    %53 = vmatpush.msra.mxu0 %v40
    %54 = vmatpush.msra.mxu0 %v39
    %55 = vmatpush.msra.mxu0 %v38
    %56 = vmatpush.msra.mxu0 %v37
    %57 = vmatpush.msra.mxu0 %v36
    %58 = vmatpush.msra.mxu0 %v35
    %59 = vmatpush.msra.mxu0 %v34
    %60 = vmatpush.msra.mxu0 %v33
    %61 = vmatpush.msra.mxu0 %v32
    %62 = vmatpush.msra.mxu0 %v31
    %63 = vmatmul.f32.gmra.mxu0 %v27
    %v64 = vpop.f32.mrf.mxu0
    %v65 = vadd.f32 0.0, %v64
    %66 = vmatmul.f32.gmra.mxu0 %v28
    %v67 = vpop.f32.mrf.mxu0
    %v68 = vadd.f32 0.0, %v67
    %69 = vmatmul.f32.gmra.mxu0 %v29
    %v70 = vpop.f32.mrf.mxu0
    %v71 = vadd.f32 0.0, %v70
    %72 = vmatmul.f32.gmra.mxu0 %v30
    %v73 = vpop.f32.mrf.mxu0
    %v74 = vadd.f32 0.0, %v73
    %75 = vdwg.mxu0
    %v76 = vadd.f32 %v23, %v65
    %v77 = vadd.f32 %v24, %v68
    %v78 = vadd.f32 %v25, %v71
    %v79 = vadd.f32 %v26, %v74
    %80 = vst [vmem:[#allocation2] sm:$0xff] %v76
    %81 = vst [vmem:[#allocation2 + $0x8] sm:$0xff] %v77
    %82 = vst [vmem:[#allocation2 + $0x10] sm:$0xff] %v78
    %83 = vst [vmem:[#allocation2 + $0x18] sm:$0xff] %v79
    // Predicated region
    $region18: #{patch_embed_forward.1} parent=1 // pred_check
      %p84 = pneg %p15
    $region19: #{patch_embed_forward.1} parent=1 // pred_check_branch
      %86 = sbr.rel (%p84) target = $region21
    $region20: #{patch_embed_forward.1} parent=1 // pred_region
      %v87 = vld [vmem:[#allocation2] sm:$0xff]
      %v88 = vld [vmem:[#allocation2 + $0x8] sm:$0xff]
      %v89 = vld [vmem:[#allocation2 + $0x10] sm:$0xff]
      %v90 = vld [vmem:[#allocation2 + $0x18] sm:$0xff]
      %v91 = vld [vmem:[%s2] sm:$0x1]
      %v93 = vperm.slane %v91, 0
      %v95 = vadd.f32 %v87, %v93
      %v96 = vadd.f32 %v88, %v93
      %v97 = vadd.f32 %v89, %v93
      %v98 = vadd.f32 %v90, %v93
      %99 = vst [vmem:[#allocation3] sm:$0xff] %v95
      %100 = vst [vmem:[#allocation3 + $0x8] sm:$0xff] %v96
      %101 = vst [vmem:[#allocation3 + $0x10] sm:$0xff] %v97
      %102 = vst [vmem:[#allocation3 + $0x18] sm:$0xff] %v98
    $region21: #{patch_embed_forward.1} parent=1 // pred_fallthru
      _
    // Predicated region
    $region22: #{patch_embed_forward.1} parent=1 // pred_check
      _
    $region23: #{patch_embed_forward.1} parent=1 // pred_check_branch
      %104 = sbr.rel (0) target = $region25
    $region24: #{patch_embed_forward.1} parent=1 // pred_region
      %106 = vsyncadd [#allocation4], 0
      %s107 = sshll.u32 [#allocation3], 4
      %s108 = int_to_ptr.vmem [resolvable:$true] %s107
      %s109 = sshll.u32 %s3, 4
      %s110 = int_to_ptr.hbm [resolvable:$true] %s109
      %115 = dma.vmem_to_hbm [thread:$0]  %s108, 512, %s110, [#allocation4], 128, 128, 8
    $region25: #{patch_embed_forward.1} parent=1 // pred_fallthru
      _
    // Predicated region
    $region26: #{patch_embed_forward.1} parent=1 // pred_check
      _
    $region27: #{patch_embed_forward.1} parent=1 // pred_check_branch
      %117 = sbr.rel (0) target = $region29
    $region28: #{patch_embed_forward.1} parent=1 // pred_region
      %119 = dma.done [#allocation4], 512
    $region29: #{patch_embed_forward.1} parent=1 // pred_fallthru
      _
    %120 = vsyncpa [#allocation4], 1

</llo_original>
